<compile_context>
chip_gen: v5e
topology: v5e:2x2
jax: 0.10.0
libtpu: 0.0.40
codegen_flags: <defaults>
</compile_context>

<pallas_src>
import jax
import jax.numpy as jnp
from jax.experimental import pallas as pl
from jax.experimental.pallas import tpu as pltpu


def _round_up(x, m):
    return ((x + m - 1) // m) * m


def frequency_bias_kernel(c0_ref, c1_ref, w_ref, o_ref):
    """One batch tile.

    c0_ref, c1_ref : (B_t, N)       float32
    w_ref          : (N, N, P_pad)  matmul dtype (bf16 or f32), fully VMEM resident
    o_ref          : (B_t, P_pad)   float32
    """
    n = c0_ref.shape[1]

    # LHS of every matmul: cast once, keep live (small: B_t x N).
    c1 = c1_ref[...].astype(w_ref.dtype)

    acc = jnp.zeros(o_ref.shape, jnp.float32)
    # N is a static Python int -> the loop unrolls at trace time.  Each iteration is
    # one lane-dense MXU matmul plus a cheap f32 scale/accumulate; no joint slab, no
    # masked partial-lane stores, accumulator stays register/VMEM-tiny.
    for s in range(n):
        # t[b, p] = sum_o c1[b, o] * W3[s, o, p]
        t = jnp.dot(c1, w_ref[s], preferred_element_type=jnp.float32)  # (B_t, P_pad)
        # scale by c0[:, s] (narrow f32 load straight from the ref, broadcast over lanes)
        acc = acc + c0_ref[:, s:s + 1] * t

    o_ref[...] = acc


def frequency_bias_forward(obj_cands0, obj_cands1, weight, *,
                           matmul_dtype=jnp.bfloat16):
    """baseline = (c0[:, :, None] * c1[:, None, :]).reshape(B, N*N) @ weight."""
    B, N = obj_cands0.shape
    NN, P = weight.shape
    assert NN == N * N, "weight must be flattened (num_objs**2, num_preds)"

    # Lane-dense output / weight: pad the predicate dim to a multiple of 128 (zeros).
    P_pad = _round_up(P, 128)

    # Batch tiling (sublane aligned).
    #  - B <= 128 : single tile.
    #  - B <= 512 : 128-row tiles -> >=2 grid steps, so the "parallel" axis can shard
    #               across v7x's two TensorCores.
    #  - B  > 512 : 256-row tiles to fill the 256-wide MXU on v6e/v7x (still >=2 steps).
    if B <= 128:
        B_tile = _round_up(max(B, 8), 8)
    elif B <= 512:
        B_tile = 128
    else:
        B_tile = 256
    B_pad = _round_up(B, B_tile)
    grid_b = B_pad // B_tile

    c0 = obj_cands0.astype(jnp.float32)
    c1 = obj_cands1.astype(jnp.float32)
    if B_pad != B:
        c0 = jnp.pad(c0, ((0, B_pad - B), (0, 0)))
        c1 = jnp.pad(c1, ((0, B_pad - B), (0, 0)))

    # Weight as (N_sub, N_obj, P_pad); padded predicate columns are zero, so they do
    # not contribute and are sliced off at the end.
    w3 = weight.reshape(N, N, P).astype(jnp.float32)
    if P_pad != P:
        w3 = jnp.pad(w3, ((0, 0), (0, 0), (0, P_pad - P)))
    w3 = w3.astype(matmul_dtype)

    w_itemsize = jnp.dtype(matmul_dtype).itemsize
    w_bytes = N * N * P_pad * w_itemsize                       # resident, single-buffered
    io_bytes = 2 * (2 * B_tile * N * 4) + 2 * (B_tile * P_pad * 4)  # double-buffered tiles
    # Explicit VMEM budget: actual footprint + headroom for spills / compiler scratch,
    # never above the smallest physical VMEM of the targets (v7x: 64 MiB per TC).
    # NOTE: for N >~ 440 (bf16, P_pad=128) the resident weight alone would exceed this;
    # that regime needs a streamed-weight (reduction grid axis) fallback instead.
    vmem_limit = min(max(int(w_bytes + io_bytes) + (8 << 20), 32 << 20), 64 << 20)

    flops = 2 * B_pad * NN * P_pad
    bytes_accessed = int(w_bytes) + 2 * B_pad * N * 4 + B_pad * P_pad * 4

    out = pl.pallas_call(
        frequency_bias_kernel,
        out_shape=jax.ShapeDtypeStruct((B_pad, P_pad), jnp.float32),
        grid=(grid_b,),
        in_specs=[
            pl.BlockSpec((B_tile, N), lambda b: (b, 0)),          # obj_cands0 tile
            pl.BlockSpec((B_tile, N), lambda b: (b, 0)),          # obj_cands1 tile
            pl.BlockSpec((N, N, P_pad), lambda b: (0, 0, 0),      # full weight, resident,
                         pipeline_mode=pl.Buffered(1)),           # single-buffered
        ],
        out_specs=pl.BlockSpec((B_tile, P_pad), lambda b: (b, 0)),
        compiler_params=pltpu.CompilerParams(
            dimension_semantics=("parallel",),
            vmem_limit_bytes=vmem_limit,
        ),
        cost_estimate=pl.CostEstimate(
            flops=flops, transcendentals=0, bytes_accessed=bytes_accessed),
    )(c0, c1, w3)

    return out[:B, :P]


class FrequencyBias:
    """JAX/Pallas port of the PyTorch FrequencyBias module."""

    def __init__(self, pred_dist, *, matmul_dtype=jnp.bfloat16):
        # pred_dist: (num_objs, num_objs, num_preds) float32
        self.num_objs = pred_dist.shape[0]
        self.num_preds = pred_dist.shape[2]
        self.matmul_dtype = matmul_dtype
        # nn.Embedding(num_objs**2, num_preds) with weight = flattened pred_dist
        self.obj_baseline_weight = jnp.asarray(
            pred_dist, jnp.float32).reshape(-1, pred_dist.shape[2])

    def index_with_labels(self, sub_classes, obj_classes):
        # Plain gather (embedding lookup); glue, not the hot path.
        idx = sub_classes * self.num_objs + obj_classes
        return jnp.take(self.obj_baseline_weight, idx, axis=0)

    def forward(self, obj_cands0, obj_cands1):
        return frequency_bias_forward(obj_cands0, obj_cands1,
                                      self.obj_baseline_weight,
                                      matmul_dtype=self.matmul_dtype)


if __name__ == "__main__":
    num_objs = 16   # N   (realistic scene-graph size is ~151; test kept small)
    num_preds = 32  # P
    batch = 8       # B

    key = jax.random.PRNGKey(0)
    k_dist, k0, k1 = jax.random.split(key, 3)

    # Deterministic synthetic pred_dist (stands in for the precomputed frequency stats).
    pred_dist = jax.random.uniform(
        k_dist, (num_objs, num_objs, num_preds), dtype=jnp.float32)
    obj_cands0 = jax.random.uniform(k0, (batch, num_objs), dtype=jnp.float32)
    obj_cands1 = jax.random.uniform(k1, (batch, num_objs), dtype=jnp.float32)

    # Default fast path: bf16 MXU operands, f32 accumulation.
    module = FrequencyBias(pred_dist)
    baseline = jax.block_until_ready(module.forward(obj_cands0, obj_cands1))

    # Exact-parity path: f32 matmul operands.
    baseline_f32 = jax.block_until_ready(
        frequency_bias_forward(obj_cands0, obj_cands1,
                               module.obj_baseline_weight,
                               matmul_dtype=jnp.float32))

    # Pure-JAX reference (exact PyTorch forward semantics).
    joint = obj_cands0[:, :, None] * obj_cands1[:, None, :]
    ref = joint.reshape(batch, -1) @ module.obj_baseline_weight

    assert baseline.shape == (batch, num_preds)
    assert baseline.dtype == jnp.float32
    assert jnp.allclose(baseline_f32, ref, rtol=1e-5, atol=1e-5)
    # bf16 MXU operands (f32 accumulate) -> loosened tolerance vs the f32 reference.
    assert jnp.allclose(baseline, ref, rtol=2e-2, atol=2e-2)

    print("KERNEL_OK")
</pallas_src>

<mosaic_0001>
module attributes {stable_mosaic.version = 11 : i64} {
  func.func @frequency_bias_kernel(%arg0: i32, %arg1: memref<8x16xf32, #tpu.memory_space<vmem>>, %arg2: memref<8x16xf32, #tpu.memory_space<vmem>>, %arg3: memref<16x16x128xbf16, #tpu.memory_space<vmem>>, %arg4: memref<8x128xf32, #tpu.memory_space<vmem>>) attributes {dimension_semantics = [#tpu.dimension_semantics<parallel>], iteration_bounds = array<i64: 1>, scalar_prefetch = 0 : i64, scratch_operands = 0 : i64, tpu.core_type = #tpu.core_type<tc>, window_params = [{transform_indices = @transform_0, window_bounds = array<i64: 8, 16>}, {transform_indices = @transform_1, window_bounds = array<i64: 8, 16>}, {pipeline_mode = #tpu.pipeline_mode<synchronous>, transform_indices = @transform_2, window_bounds = array<i64: 16, 16, 128>}, {transform_indices = @transform_3, window_bounds = array<i64: 8, 128>}]} {
    %c0 = arith.constant 0 : index
    %c0_0 = arith.constant 0 : index
    %0 = vector.load %arg2[%c0, %c0_0] : memref<8x16xf32, #tpu.memory_space<vmem>>, vector<8x16xf32>
    %1 = arith.truncf %0 : vector<8x16xf32> to vector<8x16xbf16>
    %cst = arith.constant 0.000000e+00 : f32
    %2 = vector.broadcast %cst : f32 to vector<8x128xf32>
    %c0_1 = arith.constant 0 : index
    %c0_2 = arith.constant 0 : index
    %c0_3 = arith.constant 0 : index
    %3 = vector.load %arg3[%c0_1, %c0_2, %c0_3] : memref<16x16x128xbf16, #tpu.memory_space<vmem>>, vector<1x16x128xbf16>
    %4 = vector.shape_cast %3 : vector<1x16x128xbf16> to vector<16x128xbf16>
    %cst_4 = arith.constant dense<0.000000e+00> : vector<8x128xf32>
    %5 = tpu.matmul %1, %4, %cst_4 {dimension_numbers = #tpu.dot_dimension_numbers<[1], [0], [0], [1], [0, 0, 1, 1], [], []>} : vector<8x16xbf16>, vector<16x128xbf16>, vector<8x128xf32> -> vector<8x128xf32>
    %c0_5 = arith.constant 0 : index
    %c0_6 = arith.constant 0 : index
    %6 = vector.load %arg1[%c0_5, %c0_6] : memref<8x16xf32, #tpu.memory_space<vmem>>, vector<8x1xf32>
    %7 = vector.broadcast %6 : vector<8x1xf32> to vector<8x128xf32>
    %8 = arith.mulf %7, %5 : vector<8x128xf32>
    %9 = arith.addf %2, %8 : vector<8x128xf32>
    %c1 = arith.constant 1 : index
    %c0_7 = arith.constant 0 : index
    %c0_8 = arith.constant 0 : index
    %10 = vector.load %arg3[%c1, %c0_7, %c0_8] : memref<16x16x128xbf16, #tpu.memory_space<vmem>>, vector<1x16x128xbf16>
    %11 = vector.shape_cast %10 : vector<1x16x128xbf16> to vector<16x128xbf16>
    %cst_9 = arith.constant dense<0.000000e+00> : vector<8x128xf32>
    %12 = tpu.matmul %1, %11, %cst_9 {dimension_numbers = #tpu.dot_dimension_numbers<[1], [0], [0], [1], [0, 0, 1, 1], [], []>} : vector<8x16xbf16>, vector<16x128xbf16>, vector<8x128xf32> -> vector<8x128xf32>
    %c0_10 = arith.constant 0 : index
    %c1_11 = arith.constant 1 : index
    %13 = vector.load %arg1[%c0_10, %c1_11] : memref<8x16xf32, #tpu.memory_space<vmem>>, vector<8x1xf32>
    %14 = vector.broadcast %13 : vector<8x1xf32> to vector<8x128xf32>
    %15 = arith.mulf %14, %12 : vector<8x128xf32>
    %16 = arith.addf %9, %15 : vector<8x128xf32>
    %c2 = arith.constant 2 : index
    %c0_12 = arith.constant 0 : index
    %c0_13 = arith.constant 0 : index
    %17 = vector.load %arg3[%c2, %c0_12, %c0_13] : memref<16x16x128xbf16, #tpu.memory_space<vmem>>, vector<1x16x128xbf16>
    %18 = vector.shape_cast %17 : vector<1x16x128xbf16> to vector<16x128xbf16>
    %cst_14 = arith.constant dense<0.000000e+00> : vector<8x128xf32>
    %19 = tpu.matmul %1, %18, %cst_14 {dimension_numbers = #tpu.dot_dimension_numbers<[1], [0], [0], [1], [0, 0, 1, 1], [], []>} : vector<8x16xbf16>, vector<16x128xbf16>, vector<8x128xf32> -> vector<8x128xf32>
    %c0_15 = arith.constant 0 : index
    %c2_16 = arith.constant 2 : index
    %20 = vector.load %arg1[%c0_15, %c2_16] : memref<8x16xf32, #tpu.memory_space<vmem>>, vector<8x1xf32>
    %21 = vector.broadcast %20 : vector<8x1xf32> to vector<8x128xf32>
    %22 = arith.mulf %21, %19 : vector<8x128xf32>
    %23 = arith.addf %16, %22 : vector<8x128xf32>
    %c3 = arith.constant 3 : index
    %c0_17 = arith.constant 0 : index
    %c0_18 = arith.constant 0 : index
    %24 = vector.load %arg3[%c3, %c0_17, %c0_18] : memref<16x16x128xbf16, #tpu.memory_space<vmem>>, vector<1x16x128xbf16>
    %25 = vector.shape_cast %24 : vector<1x16x128xbf16> to vector<16x128xbf16>
    %cst_19 = arith.constant dense<0.000000e+00> : vector<8x128xf32>
    %26 = tpu.matmul %1, %25, %cst_19 {dimension_numbers = #tpu.dot_dimension_numbers<[1], [0], [0], [1], [0, 0, 1, 1], [], []>} : vector<8x16xbf16>, vector<16x128xbf16>, vector<8x128xf32> -> vector<8x128xf32>
    %c0_20 = arith.constant 0 : index
    %c3_21 = arith.constant 3 : index
    %27 = vector.load %arg1[%c0_20, %c3_21] : memref<8x16xf32, #tpu.memory_space<vmem>>, vector<8x1xf32>
    %28 = vector.broadcast %27 : vector<8x1xf32> to vector<8x128xf32>
    %29 = arith.mulf %28, %26 : vector<8x128xf32>
    %30 = arith.addf %23, %29 : vector<8x128xf32>
    %c4 = arith.constant 4 : index
    %c0_22 = arith.constant 0 : index
    %c0_23 = arith.constant 0 : index
    %31 = vector.load %arg3[%c4, %c0_22, %c0_23] : memref<16x16x128xbf16, #tpu.memory_space<vmem>>, vector<1x16x128xbf16>
    %32 = vector.shape_cast %31 : vector<1x16x128xbf16> to vector<16x128xbf16>
    %cst_24 = arith.constant dense<0.000000e+00> : vector<8x128xf32>
    %33 = tpu.matmul %1, %32, %cst_24 {dimension_numbers = #tpu.dot_dimension_numbers<[1], [0], [0], [1], [0, 0, 1, 1], [], []>} : vector<8x16xbf16>, vector<16x128xbf16>, vector<8x128xf32> -> vector<8x128xf32>
    %c0_25 = arith.constant 0 : index
    %c4_26 = arith.constant 4 : index
    %34 = vector.load %arg1[%c0_25, %c4_26] : memref<8x16xf32, #tpu.memory_space<vmem>>, vector<8x1xf32>
    %35 = vector.broadcast %34 : vector<8x1xf32> to vector<8x128xf32>
    %36 = arith.mulf %35, %33 : vector<8x128xf32>
    %37 = arith.addf %30, %36 : vector<8x128xf32>
    %c5 = arith.constant 5 : index
    %c0_27 = arith.constant 0 : index
    %c0_28 = arith.constant 0 : index
    %38 = vector.load %arg3[%c5, %c0_27, %c0_28] : memref<16x16x128xbf16, #tpu.memory_space<vmem>>, vector<1x16x128xbf16>
    %39 = vector.shape_cast %38 : vector<1x16x128xbf16> to vector<16x128xbf16>
    %cst_29 = arith.constant dense<0.000000e+00> : vector<8x128xf32>
    %40 = tpu.matmul %1, %39, %cst_29 {dimension_numbers = #tpu.dot_dimension_numbers<[1], [0], [0], [1], [0, 0, 1, 1], [], []>} : vector<8x16xbf16>, vector<16x128xbf16>, vector<8x128xf32> -> vector<8x128xf32>
    %c0_30 = arith.constant 0 : index
    %c5_31 = arith.constant 5 : index
    %41 = vector.load %arg1[%c0_30, %c5_31] : memref<8x16xf32, #tpu.memory_space<vmem>>, vector<8x1xf32>
    %42 = vector.broadcast %41 : vector<8x1xf32> to vector<8x128xf32>
    %43 = arith.mulf %42, %40 : vector<8x128xf32>
    %44 = arith.addf %37, %43 : vector<8x128xf32>
    %c6 = arith.constant 6 : index
    %c0_32 = arith.constant 0 : index
    %c0_33 = arith.constant 0 : index
    %45 = vector.load %arg3[%c6, %c0_32, %c0_33] : memref<16x16x128xbf16, #tpu.memory_space<vmem>>, vector<1x16x128xbf16>
    %46 = vector.shape_cast %45 : vector<1x16x128xbf16> to vector<16x128xbf16>
    %cst_34 = arith.constant dense<0.000000e+00> : vector<8x128xf32>
    %47 = tpu.matmul %1, %46, %cst_34 {dimension_numbers = #tpu.dot_dimension_numbers<[1], [0], [0], [1], [0, 0, 1, 1], [], []>} : vector<8x16xbf16>, vector<16x128xbf16>, vector<8x128xf32> -> vector<8x128xf32>
    %c0_35 = arith.constant 0 : index
    %c6_36 = arith.constant 6 : index
    %48 = vector.load %arg1[%c0_35, %c6_36] : memref<8x16xf32, #tpu.memory_space<vmem>>, vector<8x1xf32>
    %49 = vector.broadcast %48 : vector<8x1xf32> to vector<8x128xf32>
    %50 = arith.mulf %49, %47 : vector<8x128xf32>
    %51 = arith.addf %44, %50 : vector<8x128xf32>
    %c7 = arith.constant 7 : index
    %c0_37 = arith.constant 0 : index
    %c0_38 = arith.constant 0 : index
    %52 = vector.load %arg3[%c7, %c0_37, %c0_38] : memref<16x16x128xbf16, #tpu.memory_space<vmem>>, vector<1x16x128xbf16>
    %53 = vector.shape_cast %52 : vector<1x16x128xbf16> to vector<16x128xbf16>
    %cst_39 = arith.constant dense<0.000000e+00> : vector<8x128xf32>
    %54 = tpu.matmul %1, %53, %cst_39 {dimension_numbers = #tpu.dot_dimension_numbers<[1], [0], [0], [1], [0, 0, 1, 1], [], []>} : vector<8x16xbf16>, vector<16x128xbf16>, vector<8x128xf32> -> vector<8x128xf32>
    %c0_40 = arith.constant 0 : index
    %c7_41 = arith.constant 7 : index
    %55 = vector.load %arg1[%c0_40, %c7_41] : memref<8x16xf32, #tpu.memory_space<vmem>>, vector<8x1xf32>
    %56 = vector.broadcast %55 : vector<8x1xf32> to vector<8x128xf32>
    %57 = arith.mulf %56, %54 : vector<8x128xf32>
    %58 = arith.addf %51, %57 : vector<8x128xf32>
    %c8 = arith.constant 8 : index
    %c0_42 = arith.constant 0 : index
    %c0_43 = arith.constant 0 : index
    %59 = vector.load %arg3[%c8, %c0_42, %c0_43] : memref<16x16x128xbf16, #tpu.memory_space<vmem>>, vector<1x16x128xbf16>
    %60 = vector.shape_cast %59 : vector<1x16x128xbf16> to vector<16x128xbf16>
    %cst_44 = arith.constant dense<0.000000e+00> : vector<8x128xf32>
    %61 = tpu.matmul %1, %60, %cst_44 {dimension_numbers = #tpu.dot_dimension_numbers<[1], [0], [0], [1], [0, 0, 1, 1], [], []>} : vector<8x16xbf16>, vector<16x128xbf16>, vector<8x128xf32> -> vector<8x128xf32>
    %c0_45 = arith.constant 0 : index
    %c8_46 = arith.constant 8 : index
    %62 = vector.load %arg1[%c0_45, %c8_46] : memref<8x16xf32, #tpu.memory_space<vmem>>, vector<8x1xf32>
    %63 = vector.broadcast %62 : vector<8x1xf32> to vector<8x128xf32>
    %64 = arith.mulf %63, %61 : vector<8x128xf32>
    %65 = arith.addf %58, %64 : vector<8x128xf32>
    %c9 = arith.constant 9 : index
    %c0_47 = arith.constant 0 : index
    %c0_48 = arith.constant 0 : index
    %66 = vector.load %arg3[%c9, %c0_47, %c0_48] : memref<16x16x128xbf16, #tpu.memory_space<vmem>>, vector<1x16x128xbf16>
    %67 = vector.shape_cast %66 : vector<1x16x128xbf16> to vector<16x128xbf16>
    %cst_49 = arith.constant dense<0.000000e+00> : vector<8x128xf32>
    %68 = tpu.matmul %1, %67, %cst_49 {dimension_numbers = #tpu.dot_dimension_numbers<[1], [0], [0], [1], [0, 0, 1, 1], [], []>} : vector<8x16xbf16>, vector<16x128xbf16>, vector<8x128xf32> -> vector<8x128xf32>
    %c0_50 = arith.constant 0 : index
    %c9_51 = arith.constant 9 : index
    %69 = vector.load %arg1[%c0_50, %c9_51] : memref<8x16xf32, #tpu.memory_space<vmem>>, vector<8x1xf32>
    %70 = vector.broadcast %69 : vector<8x1xf32> to vector<8x128xf32>
    %71 = arith.mulf %70, %68 : vector<8x128xf32>
    %72 = arith.addf %65, %71 : vector<8x128xf32>
    %c10 = arith.constant 10 : index
    %c0_52 = arith.constant 0 : index
    %c0_53 = arith.constant 0 : index
    %73 = vector.load %arg3[%c10, %c0_52, %c0_53] : memref<16x16x128xbf16, #tpu.memory_space<vmem>>, vector<1x16x128xbf16>
    %74 = vector.shape_cast %73 : vector<1x16x128xbf16> to vector<16x128xbf16>
    %cst_54 = arith.constant dense<0.000000e+00> : vector<8x128xf32>
    %75 = tpu.matmul %1, %74, %cst_54 {dimension_numbers = #tpu.dot_dimension_numbers<[1], [0], [0], [1], [0, 0, 1, 1], [], []>} : vector<8x16xbf16>, vector<16x128xbf16>, vector<8x128xf32> -> vector<8x128xf32>
    %c0_55 = arith.constant 0 : index
    %c10_56 = arith.constant 10 : index
    %76 = vector.load %arg1[%c0_55, %c10_56] : memref<8x16xf32, #tpu.memory_space<vmem>>, vector<8x1xf32>
    %77 = vector.broadcast %76 : vector<8x1xf32> to vector<8x128xf32>
    %78 = arith.mulf %77, %75 : vector<8x128xf32>
    %79 = arith.addf %72, %78 : vector<8x128xf32>
    %c11 = arith.constant 11 : index
    %c0_57 = arith.constant 0 : index
    %c0_58 = arith.constant 0 : index
    %80 = vector.load %arg3[%c11, %c0_57, %c0_58] : memref<16x16x128xbf16, #tpu.memory_space<vmem>>, vector<1x16x128xbf16>
    %81 = vector.shape_cast %80 : vector<1x16x128xbf16> to vector<16x128xbf16>
    %cst_59 = arith.constant dense<0.000000e+00> : vector<8x128xf32>
    %82 = tpu.matmul %1, %81, %cst_59 {dimension_numbers = #tpu.dot_dimension_numbers<[1], [0], [0], [1], [0, 0, 1, 1], [], []>} : vector<8x16xbf16>, vector<16x128xbf16>, vector<8x128xf32> -> vector<8x128xf32>
    %c0_60 = arith.constant 0 : index
    %c11_61 = arith.constant 11 : index
    %83 = vector.load %arg1[%c0_60, %c11_61] : memref<8x16xf32, #tpu.memory_space<vmem>>, vector<8x1xf32>
    %84 = vector.broadcast %83 : vector<8x1xf32> to vector<8x128xf32>
    %85 = arith.mulf %84, %82 : vector<8x128xf32>
    %86 = arith.addf %79, %85 : vector<8x128xf32>
    %c12 = arith.constant 12 : index
    %c0_62 = arith.constant 0 : index
    %c0_63 = arith.constant 0 : index
    %87 = vector.load %arg3[%c12, %c0_62, %c0_63] : memref<16x16x128xbf16, #tpu.memory_space<vmem>>, vector<1x16x128xbf16>
    %88 = vector.shape_cast %87 : vector<1x16x128xbf16> to vector<16x128xbf16>
    %cst_64 = arith.constant dense<0.000000e+00> : vector<8x128xf32>
    %89 = tpu.matmul %1, %88, %cst_64 {dimension_numbers = #tpu.dot_dimension_numbers<[1], [0], [0], [1], [0, 0, 1, 1], [], []>} : vector<8x16xbf16>, vector<16x128xbf16>, vector<8x128xf32> -> vector<8x128xf32>
    %c0_65 = arith.constant 0 : index
    %c12_66 = arith.constant 12 : index
    %90 = vector.load %arg1[%c0_65, %c12_66] : memref<8x16xf32, #tpu.memory_space<vmem>>, vector<8x1xf32>
    %91 = vector.broadcast %90 : vector<8x1xf32> to vector<8x128xf32>
    %92 = arith.mulf %91, %89 : vector<8x128xf32>
    %93 = arith.addf %86, %92 : vector<8x128xf32>
    %c13 = arith.constant 13 : index
    %c0_67 = arith.constant 0 : index
    %c0_68 = arith.constant 0 : index
    %94 = vector.load %arg3[%c13, %c0_67, %c0_68] : memref<16x16x128xbf16, #tpu.memory_space<vmem>>, vector<1x16x128xbf16>
    %95 = vector.shape_cast %94 : vector<1x16x128xbf16> to vector<16x128xbf16>
    %cst_69 = arith.constant dense<0.000000e+00> : vector<8x128xf32>
    %96 = tpu.matmul %1, %95, %cst_69 {dimension_numbers = #tpu.dot_dimension_numbers<[1], [0], [0], [1], [0, 0, 1, 1], [], []>} : vector<8x16xbf16>, vector<16x128xbf16>, vector<8x128xf32> -> vector<8x128xf32>
    %c0_70 = arith.constant 0 : index
    %c13_71 = arith.constant 13 : index
    %97 = vector.load %arg1[%c0_70, %c13_71] : memref<8x16xf32, #tpu.memory_space<vmem>>, vector<8x1xf32>
    %98 = vector.broadcast %97 : vector<8x1xf32> to vector<8x128xf32>
    %99 = arith.mulf %98, %96 : vector<8x128xf32>
    %100 = arith.addf %93, %99 : vector<8x128xf32>
    %c14 = arith.constant 14 : index
    %c0_72 = arith.constant 0 : index
    %c0_73 = arith.constant 0 : index
    %101 = vector.load %arg3[%c14, %c0_72, %c0_73] : memref<16x16x128xbf16, #tpu.memory_space<vmem>>, vector<1x16x128xbf16>
    %102 = vector.shape_cast %101 : vector<1x16x128xbf16> to vector<16x128xbf16>
    %cst_74 = arith.constant dense<0.000000e+00> : vector<8x128xf32>
    %103 = tpu.matmul %1, %102, %cst_74 {dimension_numbers = #tpu.dot_dimension_numbers<[1], [0], [0], [1], [0, 0, 1, 1], [], []>} : vector<8x16xbf16>, vector<16x128xbf16>, vector<8x128xf32> -> vector<8x128xf32>
    %c0_75 = arith.constant 0 : index
    %c14_76 = arith.constant 14 : index
    %104 = vector.load %arg1[%c0_75, %c14_76] : memref<8x16xf32, #tpu.memory_space<vmem>>, vector<8x1xf32>
    %105 = vector.broadcast %104 : vector<8x1xf32> to vector<8x128xf32>
    %106 = arith.mulf %105, %103 : vector<8x128xf32>
    %107 = arith.addf %100, %106 : vector<8x128xf32>
    %c15 = arith.constant 15 : index
    %c0_77 = arith.constant 0 : index
    %c0_78 = arith.constant 0 : index
    %108 = vector.load %arg3[%c15, %c0_77, %c0_78] : memref<16x16x128xbf16, #tpu.memory_space<vmem>>, vector<1x16x128xbf16>
    %109 = vector.shape_cast %108 : vector<1x16x128xbf16> to vector<16x128xbf16>
    %cst_79 = arith.constant dense<0.000000e+00> : vector<8x128xf32>
    %110 = tpu.matmul %1, %109, %cst_79 {dimension_numbers = #tpu.dot_dimension_numbers<[1], [0], [0], [1], [0, 0, 1, 1], [], []>} : vector<8x16xbf16>, vector<16x128xbf16>, vector<8x128xf32> -> vector<8x128xf32>
    %c0_80 = arith.constant 0 : index
    %c15_81 = arith.constant 15 : index
    %111 = vector.load %arg1[%c0_80, %c15_81] : memref<8x16xf32, #tpu.memory_space<vmem>>, vector<8x1xf32>
    %112 = vector.broadcast %111 : vector<8x1xf32> to vector<8x128xf32>
    %113 = arith.mulf %112, %110 : vector<8x128xf32>
    %114 = arith.addf %107, %113 : vector<8x128xf32>
    %c0_82 = arith.constant 0 : index
    %c0_83 = arith.constant 0 : index
    %115 = vector.load %arg4[%c0_82, %c0_83] : memref<8x128xf32, #tpu.memory_space<vmem>>, vector<8x128xf32>
    tpu.vector_store %arg4[%c0_82, %c0_83], %114 {strides = array<i32>} : memref<8x128xf32, #tpu.memory_space<vmem>>, vector<8x128xf32>,
    return
  }
  func.func @transform_0(%arg0: i32) -> (i32, i32) {
    %c0_i32 = arith.constant 0 : i32
    %c0_i32_0 = arith.constant 0 : i32
    return %arg0, %c0_i32 : i32, i32
  }
  func.func @transform_1(%arg0: i32) -> (i32, i32) {
    %c0_i32 = arith.constant 0 : i32
    %c0_i32_0 = arith.constant 0 : i32
    return %arg0, %c0_i32 : i32, i32
  }
  func.func @transform_2(%arg0: i32) -> (i32, i32, i32) {
    %c0_i32 = arith.constant 0 : i32
    %c0_i32_0 = arith.constant 0 : i32
    %c0_i32_1 = arith.constant 0 : i32
    %c0_i32_2 = arith.constant 0 : i32
    return %c0_i32, %c0_i32_0, %c0_i32_1 : i32, i32, i32
  }
  func.func @transform_3(%arg0: i32) -> (i32, i32) {
    %c0_i32 = arith.constant 0 : i32
    %c0_i32_0 = arith.constant 0 : i32
    return %arg0, %c0_i32 : i32, i32
  }
}

</mosaic_0001>

<llo_original>
// kernel: tpu_custom_call.1
$region0: #{tpu_custom_call.1}
  #allocation0 [shape = 'u32[]', space=smem, size = 0x4, offset = 0x4, fixed_abs, tag = 'smem constant byte address 0x4 - core index']
  #allocation1 [shape = 'u32[72,128]{1,0:T(1,128)}', space=vmem, size = 0x9000, scoped, tag = 'internal scratch']
  %s0 = inlined_call_operand.hbm [shape: f32[8,16], index: 0, kind: input, shape index: {}]
  %s1 = inlined_call_operand.hbm [shape: f32[8,16], index: 1, kind: input, shape index: {}]
  %s2 = inlined_call_operand.hbm [shape: bf16[16,16,128], index: 2, kind: input, shape index: {}]
  %s3 = inlined_call_operand.hbm [shape: f32[8,128], index: 3, kind: output, shape index: {}]
  %s4 = sld [smem:[#allocation0]]
  $region34: #{tpu_custom_call.1} parent=0
    _
  %s6 = ssub.s32 1, %s4
  %s7 = scalar_select 0, %s6, %s4
  $region1: #{tpu_custom_call.1} parent=0
    #allocation2 [shape = 'u8[4096]{0}', space=vmem, size = 0x1000, scoped, tag = 'input window, operand 0, single buffered']
    #allocation3 [shape = 's32[1]{0}', space=sflag, size = 0x4, scoped, tag = 'scoped memory for tpu_custom_call.1']
    #allocation4 [shape = 's32[1]{0}', space=sflag, size = 0x4, scoped, tag = 'scoped memory for tpu_custom_call.1']
    #allocation5 [shape = 'u8[4096]{0}', space=vmem, size = 0x1000, scoped, tag = 'input window, operand 1, single buffered']
    #allocation6 [shape = 's32[1]{0}', space=sflag, size = 0x4, scoped, tag = 'scoped memory for tpu_custom_call.1']
    #allocation7 [shape = 'u8[65536]{0}', space=vmem, size = 0x10000, scoped, tag = 'input window, operand 2, single buffered']
    #allocation8 [shape = 'u8[4096]{0}', space=vmem, size = 0x1000, scoped, tag = 'output window, operand 0, single buffered']
    %8 = vsyncpa [#allocation3], 0
    %9 = vsyncpa [#allocation6], 0
    %10 = vsyncpa [#allocation4], 0
    // Predicated region
    $region2: #{tpu_custom_call.1} parent=1 // pred_check
      _
    $region3: #{tpu_custom_call.1} parent=1 // pred_check_branch
      %12 = sbr.rel (0) target = $region5
    $region4: #{tpu_custom_call.1} parent=1 // pred_region
      %14 = vsyncadd [#allocation3], 0
      %s16 = sshll.u32 %s0, 4
      %s17 = int_to_ptr.hbm [resolvable:$true] %s16
      %s18 = sshll.u32 [#allocation2], 4
      %s19 = int_to_ptr.vmem [resolvable:$true] %s18
      %21 = dma.hbm_to_vmem [thread:$0]  %s17, 128, %s19, [#allocation3]
    $region5: #{tpu_custom_call.1} parent=1 // pred_fallthru
      _
    // Predicated region
    $region6: #{tpu_custom_call.1} parent=1 // pred_check
      _
    $region7: #{tpu_custom_call.1} parent=1 // pred_check_branch
      %23 = sbr.rel (0) target = $region9
    $region8: #{tpu_custom_call.1} parent=1 // pred_region
      %25 = vsyncadd [#allocation6], 0
      %s27 = sshll.u32 %s1, 4
      %s28 = int_to_ptr.hbm [resolvable:$true] %s27
      %s29 = sshll.u32 [#allocation5], 4
      %s30 = int_to_ptr.vmem [resolvable:$true] %s29
      %32 = dma.hbm_to_vmem [thread:$0]  %s28, 128, %s30, [#allocation6]
    $region9: #{tpu_custom_call.1} parent=1 // pred_fallthru
      _
    // Predicated region
    $region10: #{tpu_custom_call.1} parent=1 // pred_check
      _
    $region11: #{tpu_custom_call.1} parent=1 // pred_check_branch
      %34 = sbr.rel (0) target = $region13
    $region12: #{tpu_custom_call.1} parent=1 // pred_region
      %36 = vsyncadd [#allocation6], 0
      %s37 = sshll.u32 %s2, 4
      %s38 = int_to_ptr.hbm [resolvable:$true] %s37
      %s39 = sshll.u32 [#allocation7], 4
      %s40 = int_to_ptr.vmem [resolvable:$true] %s39
      %45 = dma.hbm_to_vmem [thread:$0]  %s38, 2048, %s40, [#allocation6], 64, 64, 4
    $region13: #{tpu_custom_call.1} parent=1 // pred_fallthru
      _
    // Predicated region
    $region14: #{tpu_custom_call.1} parent=1 // pred_check
      _
    $region15: #{tpu_custom_call.1} parent=1 // pred_check_branch
      %47 = sbr.rel (0) target = $region17
    $region16: #{tpu_custom_call.1} parent=1 // pred_region
      %49 = dma.done [#allocation3], 128
    $region17: #{tpu_custom_call.1} parent=1 // pred_fallthru
      _
    // Predicated region
    $region18: #{tpu_custom_call.1} parent=1 // pred_check
      _
    $region19: #{tpu_custom_call.1} parent=1 // pred_check_branch
      %51 = sbr.rel (0) target = $region21
    $region20: #{tpu_custom_call.1} parent=1 // pred_region
      %53 = dma.done [#allocation6], 128
    $region21: #{tpu_custom_call.1} parent=1 // pred_fallthru
      _
    // Predicated region
    $region22: #{tpu_custom_call.1} parent=1 // pred_check
      _
    $region23: #{tpu_custom_call.1} parent=1 // pred_check_branch
      %55 = sbr.rel (0) target = $region25
    $region24: #{tpu_custom_call.1} parent=1 // pred_region
      %57 = dma.done [#allocation6], 2048
    $region25: #{tpu_custom_call.1} parent=1 // pred_fallthru
      _
    %v59 = vld [vmem:[#allocation5] sm:$0xff]
    %v60 = vpack.c.bf16 %v59, %v59
    %v61 = vld [vmem:[#allocation7] sm:$0xf]
    %v62 = vld [vmem:[#allocation7 + $0x4] sm:$0xf]
    %v65 = vunpack.c.l.b16 %v61
    %v66 = vunpack.c.l.b16 %v62
    %v67 = vpack.c.b16 %v66, %v65
    %vm69 = vcmask 130048
    %v71 = vsel %vm69, %v60, 0
    %73 = vmatpush.bf16.msra.mxu0 0
    %74 = vmatpush.bf16.msra.mxu0 0
    %75 = vmatpush.bf16.msra.mxu0 0
    %76 = vmatpush.bf16.msra.mxu0 0
    %77 = vmatpush.bf16.msra.mxu0 0
    %78 = vmatpush.bf16.msra.mxu0 0
    %79 = vmatpush.bf16.msra.mxu0 0
    %80 = vmatpush.bf16.msra.mxu0 %v67
    %81 = vmatmul.bf16.gmra.mxu0 %v71
    %v82 = vpop.f32.mrf.mxu0
    %v83 = vadd.f32 0.0, %v82
    %v84 = vpop.f32.mrf.mxu0
    %85 = vdwg.mxu0
    %v86 = vld [vmem:[#allocation2] sm:$0xff]
    %88 = vset.pattern.permute.xlu0 0
    %89 = vperm.xlu0 %88, %v86
    %v90 = vpop.permute.xlu0 %89
    %v92 = vmul.f32 %v90, %v83
    %v93 = vadd.f32 %v92, 0.0
    %s94 = scalar_lea.vmem [#allocation7], 8
    %v95 = vld [vmem:[%s94] sm:$0xf]
    %v96 = vld [vmem:[%s94 + $0x4] sm:$0xf]
    %v99 = vunpack.c.l.b16 %v95
    %v100 = vunpack.c.l.b16 %v96
    %v101 = vpack.c.b16 %v100, %v99
    %103 = vmatpush.bf16.msra.mxu0 0
    %104 = vmatpush.bf16.msra.mxu0 0
    %105 = vmatpush.bf16.msra.mxu0 0
    %106 = vmatpush.bf16.msra.mxu0 0
    %107 = vmatpush.bf16.msra.mxu0 0
    %108 = vmatpush.bf16.msra.mxu0 0
    %109 = vmatpush.bf16.msra.mxu0 0
    %110 = vmatpush.bf16.msra.mxu0 %v101
    %111 = vmatmul.bf16.gmra.mxu0 %v71
    %v112 = vpop.f32.mrf.mxu0
    %v113 = vadd.f32 0.0, %v112
    %v114 = vpop.f32.mrf.mxu0
    %115 = vdwg.mxu0
    %116 = vset.pattern.permute.xlu0 1
    %117 = vperm.xlu0 %116, %v86
    %v118 = vpop.permute.xlu0 %117
    %v120 = vmul.f32 %v118, %v113
    %v121 = vadd.f32 %v93, %v120
    %s122 = scalar_lea.vmem [#allocation7], 16
    %v123 = vld [vmem:[%s122] sm:$0xf]
    %v124 = vld [vmem:[%s122 + $0x4] sm:$0xf]
    %v127 = vunpack.c.l.b16 %v123
    %v128 = vunpack.c.l.b16 %v124
    %v129 = vpack.c.b16 %v128, %v127
    %131 = vmatpush.bf16.msra.mxu0 0
    %132 = vmatpush.bf16.msra.mxu0 0
    %133 = vmatpush.bf16.msra.mxu0 0
    %134 = vmatpush.bf16.msra.mxu0 0
    %135 = vmatpush.bf16.msra.mxu0 0
    %136 = vmatpush.bf16.msra.mxu0 0
    %137 = vmatpush.bf16.msra.mxu0 0
    %138 = vmatpush.bf16.msra.mxu0 %v129
    %139 = vmatmul.bf16.gmra.mxu0 %v71
    %v140 = vpop.f32.mrf.mxu0
    %v141 = vadd.f32 0.0, %v140
    %v142 = vpop.f32.mrf.mxu0
    %143 = vdwg.mxu0
    %144 = vset.pattern.permute.xlu0 2
    %145 = vperm.xlu0 %144, %v86
    %v146 = vpop.permute.xlu0 %145
    %v148 = vmul.f32 %v146, %v141
    %v149 = vadd.f32 %v121, %v148
    %s150 = scalar_lea.vmem [#allocation7], 24
    %v151 = vld [vmem:[%s150] sm:$0xf]
    %v152 = vld [vmem:[%s150 + $0x4] sm:$0xf]
    %v155 = vunpack.c.l.b16 %v151
    %v156 = vunpack.c.l.b16 %v152
    %v157 = vpack.c.b16 %v156, %v155
    %159 = vmatpush.bf16.msra.mxu0 0
    %160 = vmatpush.bf16.msra.mxu0 0
    %161 = vmatpush.bf16.msra.mxu0 0
    %162 = vmatpush.bf16.msra.mxu0 0
    %163 = vmatpush.bf16.msra.mxu0 0
    %164 = vmatpush.bf16.msra.mxu0 0
    %165 = vmatpush.bf16.msra.mxu0 0
    %166 = vmatpush.bf16.msra.mxu0 %v157
    %167 = vmatmul.bf16.gmra.mxu0 %v71
    %v168 = vpop.f32.mrf.mxu0
    %v169 = vadd.f32 0.0, %v168
    %v170 = vpop.f32.mrf.mxu0
    %171 = vdwg.mxu0
    %172 = vset.pattern.permute.xlu0 3
    %173 = vperm.xlu0 %172, %v86
    %v174 = vpop.permute.xlu0 %173
    %v176 = vmul.f32 %v174, %v169
    %v177 = vadd.f32 %v149, %v176
    %s178 = scalar_lea.vmem [#allocation7], 32
    %v179 = vld [vmem:[%s178] sm:$0xf]
    %v180 = vld [vmem:[%s178 + $0x4] sm:$0xf]
    %v183 = vunpack.c.l.b16 %v179
    %v184 = vunpack.c.l.b16 %v180
    %v185 = vpack.c.b16 %v184, %v183
    %187 = vmatpush.bf16.msra.mxu0 0
    %188 = vmatpush.bf16.msra.mxu0 0
    %189 = vmatpush.bf16.msra.mxu0 0
    %190 = vmatpush.bf16.msra.mxu0 0
    %191 = vmatpush.bf16.msra.mxu0 0
    %192 = vmatpush.bf16.msra.mxu0 0
    %193 = vmatpush.bf16.msra.mxu0 0
    %194 = vmatpush.bf16.msra.mxu0 %v185
    %195 = vmatmul.bf16.gmra.mxu0 %v71
    %v196 = vpop.f32.mrf.mxu0
    %v197 = vadd.f32 0.0, %v196
    %v198 = vpop.f32.mrf.mxu0
    %199 = vdwg.mxu0
    %200 = vset.pattern.permute.xlu0 4
    %201 = vperm.xlu0 %200, %v86
    %v202 = vpop.permute.xlu0 %201
    %v204 = vmul.f32 %v202, %v197
    %v205 = vadd.f32 %v177, %v204
    %s206 = scalar_lea.vmem [#allocation7], 40
    %v207 = vld [vmem:[%s206] sm:$0xf]
    %v208 = vld [vmem:[%s206 + $0x4] sm:$0xf]
    %v211 = vunpack.c.l.b16 %v207
    %v212 = vunpack.c.l.b16 %v208
    %v213 = vpack.c.b16 %v212, %v211
    %215 = vmatpush.bf16.msra.mxu0 0
    %216 = vmatpush.bf16.msra.mxu0 0
    %217 = vmatpush.bf16.msra.mxu0 0
    %218 = vmatpush.bf16.msra.mxu0 0
    %219 = vmatpush.bf16.msra.mxu0 0
    %220 = vmatpush.bf16.msra.mxu0 0
    %221 = vmatpush.bf16.msra.mxu0 0
    %222 = vmatpush.bf16.msra.mxu0 %v213
    %223 = vmatmul.bf16.gmra.mxu0 %v71
    %v224 = vpop.f32.mrf.mxu0
    %v225 = vadd.f32 0.0, %v224
    %v226 = vpop.f32.mrf.mxu0
    %227 = vdwg.mxu0
    %228 = vset.pattern.permute.xlu0 5
    %229 = vperm.xlu0 %228, %v86
    %v230 = vpop.permute.xlu0 %229
    %v232 = vmul.f32 %v230, %v225
    %v233 = vadd.f32 %v205, %v232
    %s234 = scalar_lea.vmem [#allocation7], 48
    %v235 = vld [vmem:[%s234] sm:$0xf]
    %v236 = vld [vmem:[%s234 + $0x4] sm:$0xf]
    %v239 = vunpack.c.l.b16 %v235
    %v240 = vunpack.c.l.b16 %v236
    %v241 = vpack.c.b16 %v240, %v239
    %243 = vmatpush.bf16.msra.mxu0 0
    %244 = vmatpush.bf16.msra.mxu0 0
    %245 = vmatpush.bf16.msra.mxu0 0
    %246 = vmatpush.bf16.msra.mxu0 0
    %247 = vmatpush.bf16.msra.mxu0 0
    %248 = vmatpush.bf16.msra.mxu0 0
    %249 = vmatpush.bf16.msra.mxu0 0
    %250 = vmatpush.bf16.msra.mxu0 %v241
    %251 = vmatmul.bf16.gmra.mxu0 %v71
    %v252 = vpop.f32.mrf.mxu0
    %v253 = vadd.f32 0.0, %v252
    %v254 = vpop.f32.mrf.mxu0
    %255 = vdwg.mxu0
    %256 = vset.pattern.permute.xlu0 6
    %257 = vperm.xlu0 %256, %v86
    %v258 = vpop.permute.xlu0 %257
    %v260 = vmul.f32 %v258, %v253
    %v261 = vadd.f32 %v233, %v260
    %s262 = scalar_lea.vmem [#allocation7], 56
    %v263 = vld [vmem:[%s262] sm:$0xf]
    %v264 = vld [vmem:[%s262 + $0x4] sm:$0xf]
    %v267 = vunpack.c.l.b16 %v263
    %v268 = vunpack.c.l.b16 %v264
    %v269 = vpack.c.b16 %v268, %v267
    %271 = vmatpush.bf16.msra.mxu0 0
    %272 = vmatpush.bf16.msra.mxu0 0
    %273 = vmatpush.bf16.msra.mxu0 0
    %274 = vmatpush.bf16.msra.mxu0 0
    %275 = vmatpush.bf16.msra.mxu0 0
    %276 = vmatpush.bf16.msra.mxu0 0
    %277 = vmatpush.bf16.msra.mxu0 0
    %278 = vmatpush.bf16.msra.mxu0 %v269
    %279 = vmatmul.bf16.gmra.mxu0 %v71
    %v280 = vpop.f32.mrf.mxu0
    %v281 = vadd.f32 0.0, %v280
    %v282 = vpop.f32.mrf.mxu0
    %283 = vdwg.mxu0
    %284 = vset.pattern.permute.xlu0 7
    %285 = vperm.xlu0 %284, %v86
    %v286 = vpop.permute.xlu0 %285
    %v288 = vmul.f32 %v286, %v281
    %v289 = vadd.f32 %v261, %v288
    %s290 = scalar_lea.vmem [#allocation7], 64
    %v291 = vld [vmem:[%s290] sm:$0xf]
    %v292 = vld [vmem:[%s290 + $0x4] sm:$0xf]
    %v295 = vunpack.c.l.b16 %v291
    %v296 = vunpack.c.l.b16 %v292
    %v297 = vpack.c.b16 %v296, %v295
    %299 = vmatpush.bf16.msra.mxu0 0
    %300 = vmatpush.bf16.msra.mxu0 0
    %301 = vmatpush.bf16.msra.mxu0 0
    %302 = vmatpush.bf16.msra.mxu0 0
    %303 = vmatpush.bf16.msra.mxu0 0
    %304 = vmatpush.bf16.msra.mxu0 0
    %305 = vmatpush.bf16.msra.mxu0 0
    %306 = vmatpush.bf16.msra.mxu0 %v297
    %307 = vmatmul.bf16.gmra.mxu0 %v71
    %v308 = vpop.f32.mrf.mxu0
    %v309 = vadd.f32 0.0, %v308
    %v310 = vpop.f32.mrf.mxu0
    %311 = vdwg.mxu0
    %312 = vset.pattern.permute.xlu0 8
    %313 = vperm.xlu0 %312, %v86
    %v314 = vpop.permute.xlu0 %313
    %v316 = vmul.f32 %v314, %v309
    %v317 = vadd.f32 %v289, %v316
    %s318 = scalar_lea.vmem [#allocation7], 72
    %v319 = vld [vmem:[%s318] sm:$0xf]
    %v320 = vld [vmem:[%s318 + $0x4] sm:$0xf]
    %v323 = vunpack.c.l.b16 %v319
    %v324 = vunpack.c.l.b16 %v320
    %v325 = vpack.c.b16 %v324, %v323
    %327 = vmatpush.bf16.msra.mxu0 0
    %328 = vmatpush.bf16.msra.mxu0 0
    %329 = vmatpush.bf16.msra.mxu0 0
    %330 = vmatpush.bf16.msra.mxu0 0
    %331 = vmatpush.bf16.msra.mxu0 0
    %332 = vmatpush.bf16.msra.mxu0 0
    %333 = vmatpush.bf16.msra.mxu0 0
    %334 = vmatpush.bf16.msra.mxu0 %v325
    %335 = vmatmul.bf16.gmra.mxu0 %v71
    %v336 = vpop.f32.mrf.mxu0
    %v337 = vadd.f32 0.0, %v336
    %v338 = vpop.f32.mrf.mxu0
    %339 = vdwg.mxu0
    %340 = vset.pattern.permute.xlu0 9
    %341 = vperm.xlu0 %340, %v86
    %v342 = vpop.permute.xlu0 %341
    %v344 = vmul.f32 %v342, %v337
    %v345 = vadd.f32 %v317, %v344
    %s346 = scalar_lea.vmem [#allocation7], 80
    %v347 = vld [vmem:[%s346] sm:$0xf]
    %v348 = vld [vmem:[%s346 + $0x4] sm:$0xf]
    %v351 = vunpack.c.l.b16 %v347
    %v352 = vunpack.c.l.b16 %v348
    %v353 = vpack.c.b16 %v352, %v351
    %355 = vmatpush.bf16.msra.mxu0 0
    %356 = vmatpush.bf16.msra.mxu0 0
    %357 = vmatpush.bf16.msra.mxu0 0
    %358 = vmatpush.bf16.msra.mxu0 0
    %359 = vmatpush.bf16.msra.mxu0 0
    %360 = vmatpush.bf16.msra.mxu0 0
    %361 = vmatpush.bf16.msra.mxu0 0
    %362 = vmatpush.bf16.msra.mxu0 %v353
    %363 = vmatmul.bf16.gmra.mxu0 %v71
    %v364 = vpop.f32.mrf.mxu0
    %v365 = vadd.f32 0.0, %v364
    %v366 = vpop.f32.mrf.mxu0
    %367 = vdwg.mxu0
    %368 = vset.pattern.permute.xlu0 10
    %369 = vperm.xlu0 %368, %v86
    %v370 = vpop.permute.xlu0 %369
    %v372 = vmul.f32 %v370, %v365
    %v373 = vadd.f32 %v345, %v372
    %s374 = scalar_lea.vmem [#allocation7], 88
    %v375 = vld [vmem:[%s374] sm:$0xf]
    %v376 = vld [vmem:[%s374 + $0x4] sm:$0xf]
    %v379 = vunpack.c.l.b16 %v375
    %v380 = vunpack.c.l.b16 %v376
    %v381 = vpack.c.b16 %v380, %v379
    %383 = vmatpush.bf16.msra.mxu0 0
    %384 = vmatpush.bf16.msra.mxu0 0
    %385 = vmatpush.bf16.msra.mxu0 0
    %386 = vmatpush.bf16.msra.mxu0 0
    %387 = vmatpush.bf16.msra.mxu0 0
    %388 = vmatpush.bf16.msra.mxu0 0
    %389 = vmatpush.bf16.msra.mxu0 0
    %390 = vmatpush.bf16.msra.mxu0 %v381
    %391 = vmatmul.bf16.gmra.mxu0 %v71
    %v392 = vpop.f32.mrf.mxu0
    %v393 = vadd.f32 0.0, %v392
    %v394 = vpop.f32.mrf.mxu0
    %395 = vdwg.mxu0
    %396 = vset.pattern.permute.xlu0 11
    %397 = vperm.xlu0 %396, %v86
    %v398 = vpop.permute.xlu0 %397
    %v400 = vmul.f32 %v398, %v393
    %v401 = vadd.f32 %v373, %v400
    %s402 = scalar_lea.vmem [#allocation7], 96
    %v403 = vld [vmem:[%s402] sm:$0xf]
    %v404 = vld [vmem:[%s402 + $0x4] sm:$0xf]
    %v407 = vunpack.c.l.b16 %v403
    %v408 = vunpack.c.l.b16 %v404
    %v409 = vpack.c.b16 %v408, %v407
    %411 = vmatpush.bf16.msra.mxu0 0
    %412 = vmatpush.bf16.msra.mxu0 0
    %413 = vmatpush.bf16.msra.mxu0 0
    %414 = vmatpush.bf16.msra.mxu0 0
    %415 = vmatpush.bf16.msra.mxu0 0
    %416 = vmatpush.bf16.msra.mxu0 0
    %417 = vmatpush.bf16.msra.mxu0 0
    %418 = vmatpush.bf16.msra.mxu0 %v409
    %419 = vmatmul.bf16.gmra.mxu0 %v71
    %v420 = vpop.f32.mrf.mxu0
    %v421 = vadd.f32 0.0, %v420
    %v422 = vpop.f32.mrf.mxu0
    %423 = vdwg.mxu0
    %424 = vset.pattern.permute.xlu0 12
    %425 = vperm.xlu0 %424, %v86
    %v426 = vpop.permute.xlu0 %425
    %v428 = vmul.f32 %v426, %v421
    %v429 = vadd.f32 %v401, %v428
    %s430 = scalar_lea.vmem [#allocation7], 104
    %v431 = vld [vmem:[%s430] sm:$0xf]
    %v432 = vld [vmem:[%s430 + $0x4] sm:$0xf]
    %v435 = vunpack.c.l.b16 %v431
    %v436 = vunpack.c.l.b16 %v432
    %v437 = vpack.c.b16 %v436, %v435
    %439 = vmatpush.bf16.msra.mxu0 0
    %440 = vmatpush.bf16.msra.mxu0 0
    %441 = vmatpush.bf16.msra.mxu0 0
    %442 = vmatpush.bf16.msra.mxu0 0
    %443 = vmatpush.bf16.msra.mxu0 0
    %444 = vmatpush.bf16.msra.mxu0 0
    %445 = vmatpush.bf16.msra.mxu0 0
    %446 = vmatpush.bf16.msra.mxu0 %v437
    %447 = vmatmul.bf16.gmra.mxu0 %v71
    %v448 = vpop.f32.mrf.mxu0
    %v449 = vadd.f32 0.0, %v448
    %v450 = vpop.f32.mrf.mxu0
    %451 = vdwg.mxu0
    %452 = vset.pattern.permute.xlu0 13
    %453 = vperm.xlu0 %452, %v86
    %v454 = vpop.permute.xlu0 %453
    %v456 = vmul.f32 %v454, %v449
    %v457 = vadd.f32 %v429, %v456
    %s458 = scalar_lea.vmem [#allocation7], 112
    %v459 = vld [vmem:[%s458] sm:$0xf]
    %v460 = vld [vmem:[%s458 + $0x4] sm:$0xf]
    %v463 = vunpack.c.l.b16 %v459
    %v464 = vunpack.c.l.b16 %v460
    %v465 = vpack.c.b16 %v464, %v463
    %467 = vmatpush.bf16.msra.mxu0 0
    %468 = vmatpush.bf16.msra.mxu0 0
    %469 = vmatpush.bf16.msra.mxu0 0
    %470 = vmatpush.bf16.msra.mxu0 0
    %471 = vmatpush.bf16.msra.mxu0 0
    %472 = vmatpush.bf16.msra.mxu0 0
    %473 = vmatpush.bf16.msra.mxu0 0
    %474 = vmatpush.bf16.msra.mxu0 %v465
    %475 = vmatmul.bf16.gmra.mxu0 %v71
    %v476 = vpop.f32.mrf.mxu0
    %v477 = vadd.f32 0.0, %v476
    %v478 = vpop.f32.mrf.mxu0
    %479 = vdwg.mxu0
    %480 = vset.pattern.permute.xlu0 14
    %481 = vperm.xlu0 %480, %v86
    %v482 = vpop.permute.xlu0 %481
    %v484 = vmul.f32 %v482, %v477
    %v485 = vadd.f32 %v457, %v484
    %s486 = scalar_lea.vmem [#allocation7], 120
    %v487 = vld [vmem:[%s486] sm:$0xf]
    %v488 = vld [vmem:[%s486 + $0x4] sm:$0xf]
    %v491 = vunpack.c.l.b16 %v487
    %v492 = vunpack.c.l.b16 %v488
    %v493 = vpack.c.b16 %v492, %v491
    %495 = vmatpush.bf16.msra.mxu0 0
    %496 = vmatpush.bf16.msra.mxu0 0
    %497 = vmatpush.bf16.msra.mxu0 0
    %498 = vmatpush.bf16.msra.mxu0 0
    %499 = vmatpush.bf16.msra.mxu0 0
    %500 = vmatpush.bf16.msra.mxu0 0
    %501 = vmatpush.bf16.msra.mxu0 0
    %502 = vmatpush.bf16.msra.mxu0 %v493
    %503 = vmatmul.bf16.gmra.mxu0 %v71
    %v504 = vpop.f32.mrf.mxu0
    %v505 = vadd.f32 0.0, %v504
    %v506 = vpop.f32.mrf.mxu0
    %507 = vdwg.mxu0
    %508 = vset.pattern.permute.xlu0 15
    %509 = vperm.xlu0 %508, %v86
    %v510 = vpop.permute.xlu0 %509
    %v512 = vmul.f32 %v510, %v505
    %v513 = vadd.f32 %v485, %v512
    %514 = vst [vmem:[#allocation8] sm:$0xff] %v513
    // Predicated region
    $region26: #{tpu_custom_call.1} parent=1 // pred_check
      _
    $region27: #{tpu_custom_call.1} parent=1 // pred_check_branch
      %516 = sbr.rel (0) target = $region29
    $region28: #{tpu_custom_call.1} parent=1 // pred_region
      %518 = vsyncadd [#allocation4], 0
      %s520 = sshll.u32 [#allocation8], 4
      %s521 = int_to_ptr.vmem [resolvable:$true] %s520
      %s522 = sshll.u32 %s3, 4
      %s523 = int_to_ptr.hbm [resolvable:$true] %s522
      %525 = dma.vmem_to_hbm [thread:$0]  %s521, 128, %s523, [#allocation4]
    $region29: #{tpu_custom_call.1} parent=1 // pred_fallthru
      _
    // Predicated region
    $region30: #{tpu_custom_call.1} parent=1 // pred_check
      _
    $region31: #{tpu_custom_call.1} parent=1 // pred_check_branch
      %527 = sbr.rel (0) target = $region33
    $region32: #{tpu_custom_call.1} parent=1 // pred_region
      %529 = dma.done [#allocation4], 128
    $region33: #{tpu_custom_call.1} parent=1 // pred_fallthru
      _
    %530 = vsyncpa [#allocation3], 1
    %531 = vsyncpa [#allocation6], 1
    %532 = vsyncpa [#allocation4], 1

</llo_original>
